<compile_context>
chip_gen: v7x
topology: tpu7x:2x2x1
jax: 0.10.0
libtpu: 0.0.40
codegen_flags: <defaults>
</compile_context>

<pallas_src>
import jax
import jax.numpy as jnp
from jax.experimental import pallas as pl
from jax.experimental.pallas import tpu as pltpu

D_IN = 768    # BERT hidden size (fc1 in_features)
D_H1 = 128    # fc1 out_features
D_H2 = 64     # fc2 out_features
EPS = 1e-8    # F.cosine_similarity default eps


def _round_up(x, m):
    return ((x + m - 1) // m) * m


def _pick_defaults(in_itemsize):
    """Per-generation tile / scoped-VMEM defaults (perf review)."""
    kind = ""
    try:
        kind = jax.devices()[0].device_kind.lower()
    except Exception:
        pass
    if "v5" in kind:
        # v5e: 16 MiB scoped default, ~0.82 TB/s HBM -> 1024 rows already keeps
        # per-step overhead <15%; raise the scoped limit so f32 inputs fit.
        return 1024, 32 << 20
    if "v6" in kind:
        # v6e: ~1.4 TB/s HBM, 128 MiB physical VMEM.
        return 2048, 48 << 20
    # v7x (and unknown): ~3.2 TB/s HBM but only 64 MiB physical VMEM.
    tile = 2048 if in_itemsize <= 2 else 1024
    return tile, 40 << 20


def bertnn_head_kernel(x1_ref, x2_ref, w_ref, b_ref, out_ref):
    """sigmoid(cosine_similarity(x1 @ W_fused + b_fused, x2 @ W_fused + b_fused)).

    x1_ref, x2_ref : (TILE_B, 768)  [CLS] embeddings tile (backbone dtype)
    w_ref          : (768, 64)      fused fc1@fc2 weight (VMEM-resident)
    b_ref          : (1, 64)        fused bias, f32 (VMEM-resident)
    out_ref        : (TILE_B, 1)    similarity score per row, f32
    """
    w = w_ref[...]
    b = b_ref[...]

    # Cast in-kernel (no extra HBM pass); bf16 x bf16 -> f32 accumulate on the MXU.
    x1 = x1_ref[...].astype(w.dtype)
    x2 = x2_ref[...].astype(w.dtype)
    l1 = jnp.dot(x1, w, preferred_element_type=jnp.float32) + b
    l2 = jnp.dot(x2, w, preferred_element_type=jnp.float32) + b

    # Cosine similarity along the feature axis (dim=1 in PyTorch), with per-norm
    # eps clamping like modern F.cosine_similarity:
    #   cos = <l1,l2> / (max(||l1||, eps) * max(||l2||, eps))
    dot = jnp.sum(l1 * l2, axis=-1, keepdims=True)   # (TILE_B, 1)
    s1 = jnp.sum(l1 * l1, axis=-1, keepdims=True)
    s2 = jnp.sum(l2 * l2, axis=-1, keepdims=True)
    inv1 = jax.lax.rsqrt(jnp.maximum(s1, EPS * EPS))  # rsqrt -> EUP slot
    inv2 = jax.lax.rsqrt(jnp.maximum(s2, EPS * EPS))
    cos = dot * inv1 * inv2

    # Sigmoid: exp + reciprocal both stay on the EUP (full precision reciprocal).
    out_ref[...] = pl.reciprocal(1.0 + jnp.exp(-cos))


def bertnn_head(cls1, cls2, w1, b1, w2, b2, *,
                tile_b=None, compute_dtype=jnp.bfloat16, vmem_limit_bytes=None):
    """Batch-tiled, pipelined head over [CLS] embeddings.

    cls1, cls2   : (B, 768) activations, streamed in their native dtype.
    compute_dtype: MXU streaming dtype for the fused weight / in-kernel cast
                   (bf16 default; f32 accumulation + f32 epilogue inside).
    """
    B, d_in = cls1.shape
    assert d_in == D_IN and cls2.shape == (B, D_IN)

    # Fuse fc1 and fc2 once in f32 (exact up to f32 rounding; no activation
    # between them in BertNN.forward), then cast the tiny (768,64) weight.
    w_fused = (w1 @ w2).astype(compute_dtype)                        # (768, 64)
    b_fused = (b1 @ w2 + b2).reshape(1, D_H2).astype(jnp.float32)    # bias stays f32

    in_itemsize = max(jnp.dtype(cls1.dtype).itemsize, jnp.dtype(cls2.dtype).itemsize)
    default_tile, default_vmem = _pick_defaults(in_itemsize)
    if tile_b is None:
        tile_b = default_tile
    if vmem_limit_bytes is None:
        vmem_limit_bytes = default_vmem

    # Keep >=2 grid steps where possible so the "parallel" batch axis can be
    # split across TensorCores (v7x megacore); minimum sublane tile is 8 rows.
    tile = max(8, min(tile_b, _round_up(pl.cdiv(B, 2), 8)))
    grid = (pl.cdiv(B, tile),)   # non-divisible grid: partial tail block is masked

    w_itemsize = jnp.dtype(compute_dtype).itemsize
    cost = pl.CostEstimate(
        flops=2 * 2 * B * D_IN * D_H2 + 8 * B * D_H2,
        transcendentals=4 * B,                       # 2x rsqrt + exp + reciprocal per row
        bytes_accessed=(cls1.size * jnp.dtype(cls1.dtype).itemsize
                        + cls2.size * jnp.dtype(cls2.dtype).itemsize
                        + D_IN * D_H2 * w_itemsize + D_H2 * 4 + B * 4),
    )

    grid_spec = pl.GridSpec(
        grid=grid,
        in_specs=[
            # Streamed activations (depth-2 double buffering; do NOT raise to
            # Buffered(3) -- spend the VMEM on a bigger tile instead).
            pl.BlockSpec((tile, D_IN), lambda i: (i, 0)),
            pl.BlockSpec((tile, D_IN), lambda i: (i, 0)),
            # Weights / bias: constant index_map -> VMEM-resident across steps.
            pl.BlockSpec((D_IN, D_H2), lambda i: (0, 0)),
            pl.BlockSpec((1, D_H2), lambda i: (0, 0)),
        ],
        # Output is B*4 bytes (~0.07% of traffic); the lane-sparse (tile,1) block
        # is negligible, so we skip the in-kernel transpose a lane-dense layout
        # would require.
        out_specs=pl.BlockSpec((tile, 1), lambda i: (i, 0)),
    )

    sim = pl.pallas_call(
        bertnn_head_kernel,
        out_shape=jax.ShapeDtypeStruct((B, 1), jnp.float32),
        grid_spec=grid_spec,
        compiler_params=pltpu.CompilerParams(
            dimension_semantics=("parallel",),        # batch axis -> megacore / 2 TCs
            vmem_limit_bytes=vmem_limit_bytes,
        ),
        cost_estimate=cost,
    )(cls1, cls2, w_fused, b_fused)

    return sim[:, 0]  # PyTorch returns shape (B,)


def reference(cls1, cls2, w1, b1, w2, b2):
    """Plain-JAX f32 reference of the original (unfused) module math."""
    l1 = (cls1 @ w1 + b1) @ w2 + b2
    l2 = (cls2 @ w1 + b1) @ w2 + b2
    n1 = jnp.maximum(jnp.linalg.norm(l1, axis=-1), EPS)
    n2 = jnp.maximum(jnp.linalg.norm(l2, axis=-1), EPS)
    cos = jnp.sum(l1 * l2, axis=-1) / (n1 * n2)
    return jax.nn.sigmoid(cos)


if __name__ == "__main__":
    key = jax.random.PRNGKey(0)
    k_x1, k_x2, k_w1, k_b1, k_w2, k_b2 = jax.random.split(key, 6)

    # B deliberately NOT a multiple of the tile so the ragged (partial tail) grid
    # path is exercised.
    B = 13
    # Synthetic [CLS] embeddings standing in for the (frozen) transformer output.
    cls1 = jax.random.normal(k_x1, (B, D_IN), dtype=jnp.float32)
    cls2 = jax.random.normal(k_x2, (B, D_IN), dtype=jnp.float32)

    # Deterministic parameter init, matching nn.Linear shapes (stored transposed).
    lim1 = 1.0 / jnp.sqrt(D_IN)
    lim2 = 1.0 / jnp.sqrt(D_H1)
    w1 = jax.random.uniform(k_w1, (D_IN, D_H1), jnp.float32, -lim1, lim1)
    b1 = jax.random.uniform(k_b1, (D_H1,), jnp.float32, -lim1, lim1)
    w2 = jax.random.uniform(k_w2, (D_IN if False else D_H1, D_H2), jnp.float32, -lim2, lim2)
    b2 = jax.random.uniform(k_b2, (D_H2,), jnp.float32, -lim2, lim2)

    ref = reference(cls1, cls2, w1, b1, w2, b2)

    # (1) f32 path with a tiny tile: multi-step batch grid + masked partial tail.
    sim_f32 = bertnn_head(cls1, cls2, w1, b1, w2, b2,
                          tile_b=8, compute_dtype=jnp.float32)
    jax.block_until_ready(sim_f32)
    assert sim_f32.shape == (B,)
    assert jnp.allclose(sim_f32, ref, atol=1e-5, rtol=1e-5), (sim_f32, ref)

    # (2) Default fast path: f32 activations streamed untouched, bf16 fused weight,
    #     per-generation tile/vmem defaults (guard shrinks the tile for tiny B).
    sim_bf16 = bertnn_head(cls1, cls2, w1, b1, w2, b2)
    jax.block_until_ready(sim_bf16)
    assert sim_bf16.shape == (B,)
    assert jnp.allclose(sim_bf16, ref, atol=1e-2, rtol=1e-2), (sim_bf16, ref)

    print("KERNEL_OK")
</pallas_src>

<mosaic_0001>
module attributes {stable_mosaic.version = 11 : i64} {
  func.func @bertnn_head_kernel(%arg0: i32, %arg1: memref<8x768xf32, #tpu.memory_space<vmem>>, %arg2: memref<8x768xf32, #tpu.memory_space<vmem>>, %arg3: memref<768x64xf32, #tpu.memory_space<vmem>>, %arg4: memref<1x64xf32, #tpu.memory_space<vmem>>, %arg5: memref<8x1xf32, #tpu.memory_space<vmem>>) attributes {dimension_semantics = [#tpu.dimension_semantics<parallel>], iteration_bounds = array<i64: 2>, scalar_prefetch = 0 : i64, scratch_operands = 0 : i64, tpu.core_type = #tpu.core_type<tc>, window_params = [{transform_indices = @transform_0, window_bounds = array<i64: 8, 768>}, {transform_indices = @transform_1, window_bounds = array<i64: 8, 768>}, {pipeline_mode = #tpu.pipeline_mode<synchronous>, transform_indices = @transform_2, window_bounds = array<i64: 768, 64>}, {pipeline_mode = #tpu.pipeline_mode<synchronous>, transform_indices = @transform_3, window_bounds = array<i64: 1, 64>}, {transform_indices = @transform_4, window_bounds = array<i64: 8, 1>}]} {
    %c0 = arith.constant 0 : index
    %c0_0 = arith.constant 0 : index
    %0 = vector.load %arg3[%c0, %c0_0] : memref<768x64xf32, #tpu.memory_space<vmem>>, vector<768x64xf32>
    %c0_1 = arith.constant 0 : index
    %c0_2 = arith.constant 0 : index
    %1 = vector.load %arg4[%c0_1, %c0_2] : memref<1x64xf32, #tpu.memory_space<vmem>>, vector<1x64xf32>
    %c0_3 = arith.constant 0 : index
    %c0_4 = arith.constant 0 : index
    %2 = vector.load %arg1[%c0_3, %c0_4] : memref<8x768xf32, #tpu.memory_space<vmem>>, vector<8x768xf32>
    %c0_5 = arith.constant 0 : index
    %c0_6 = arith.constant 0 : index
    %3 = vector.load %arg2[%c0_5, %c0_6] : memref<8x768xf32, #tpu.memory_space<vmem>>, vector<8x768xf32>
    %cst = arith.constant dense<0.000000e+00> : vector<8x64xf32>
    %4 = tpu.matmul %2, %0, %cst {dimension_numbers = #tpu.dot_dimension_numbers<[1], [0], [0], [1], [0, 0, 1, 1], [], []>} : vector<8x768xf32>, vector<768x64xf32>, vector<8x64xf32> -> vector<8x64xf32>
    %5 = vector.broadcast %1 : vector<1x64xf32> to vector<8x64xf32>
    %6 = arith.addf %4, %5 : vector<8x64xf32>
    %cst_7 = arith.constant dense<0.000000e+00> : vector<8x64xf32>
    %7 = tpu.matmul %3, %0, %cst_7 {dimension_numbers = #tpu.dot_dimension_numbers<[1], [0], [0], [1], [0, 0, 1, 1], [], []>} : vector<8x768xf32>, vector<768x64xf32>, vector<8x64xf32> -> vector<8x64xf32>
    %8 = vector.broadcast %1 : vector<1x64xf32> to vector<8x64xf32>
    %9 = arith.addf %7, %8 : vector<8x64xf32>
    %10 = arith.mulf %6, %9 : vector<8x64xf32>
    %cst_8 = arith.constant dense<0.000000e+00> : vector<8xf32>
    %11 = vector.multi_reduction <add>, %10, %cst_8 [1] : vector<8x64xf32> to vector<8xf32>
    %12 = vector.shape_cast %11 : vector<8xf32> to vector<8x1xf32>
    %13 = arith.mulf %6, %6 : vector<8x64xf32>
    %cst_9 = arith.constant dense<0.000000e+00> : vector<8xf32>
    %14 = vector.multi_reduction <add>, %13, %cst_9 [1] : vector<8x64xf32> to vector<8xf32>
    %15 = vector.shape_cast %14 : vector<8xf32> to vector<8x1xf32>
    %16 = arith.mulf %9, %9 : vector<8x64xf32>
    %cst_10 = arith.constant dense<0.000000e+00> : vector<8xf32>
    %17 = vector.multi_reduction <add>, %16, %cst_10 [1] : vector<8x64xf32> to vector<8xf32>
    %18 = vector.shape_cast %17 : vector<8xf32> to vector<8x1xf32>
    %cst_11 = arith.constant 1.000000e-16 : f32
    %19 = vector.broadcast %cst_11 : f32 to vector<8x1xf32>
    %20 = arith.maximumf %15, %19 : vector<8x1xf32>
    %21 = math.rsqrt %20 : vector<8x1xf32>
    %cst_12 = arith.constant 1.000000e-16 : f32
    %22 = vector.broadcast %cst_12 : f32 to vector<8x1xf32>
    %23 = arith.maximumf %18, %22 : vector<8x1xf32>
    %24 = math.rsqrt %23 : vector<8x1xf32>
    %25 = arith.mulf %12, %21 : vector<8x1xf32>
    %26 = arith.mulf %25, %24 : vector<8x1xf32>
    %cst_13 = arith.constant 0.000000e+00 : f32
    %27 = vector.broadcast %cst_13 : f32 to vector<8x1xf32>
    %28 = arith.subf %27, %26 : vector<8x1xf32>
    %29 = math.exp %28 : vector<8x1xf32>
    %cst_14 = arith.constant 1.000000e+00 : f32
    %30 = vector.broadcast %cst_14 : f32 to vector<8x1xf32>
    %31 = arith.addf %30, %29 : vector<8x1xf32>
    %32 = tpu.reciprocal %31 : vector<8x1xf32> -> vector<8x1xf32>
    %c0_15 = arith.constant 0 : index
    %c0_16 = arith.constant 0 : index
    %33 = vector.load %arg5[%c0_15, %c0_16] : memref<8x1xf32, #tpu.memory_space<vmem>>, vector<8x1xf32>
    tpu.vector_store %arg5[%c0_15, %c0_16], %32 {strides = array<i32>} : memref<8x1xf32, #tpu.memory_space<vmem>>, vector<8x1xf32>,
    return
  }
  func.func @transform_0(%arg0: i32) -> (i32, i32) {
    %c0_i32 = arith.constant 0 : i32
    %c0_i32_0 = arith.constant 0 : i32
    return %arg0, %c0_i32 : i32, i32
  }
  func.func @transform_1(%arg0: i32) -> (i32, i32) {
    %c0_i32 = arith.constant 0 : i32
    %c0_i32_0 = arith.constant 0 : i32
    return %arg0, %c0_i32 : i32, i32
  }
  func.func @transform_2(%arg0: i32) -> (i32, i32) {
    %c0_i32 = arith.constant 0 : i32
    %c0_i32_0 = arith.constant 0 : i32
    %c0_i32_1 = arith.constant 0 : i32
    return %c0_i32, %c0_i32_0 : i32, i32
  }
  func.func @transform_3(%arg0: i32) -> (i32, i32) {
    %c0_i32 = arith.constant 0 : i32
    %c0_i32_0 = arith.constant 0 : i32
    %c0_i32_1 = arith.constant 0 : i32
    return %c0_i32, %c0_i32_0 : i32, i32
  }
  func.func @transform_4(%arg0: i32) -> (i32, i32) {
    %c0_i32 = arith.constant 0 : i32
    %c0_i32_0 = arith.constant 0 : i32
    return %arg0, %c0_i32 : i32, i32
  }
}

</mosaic_0001>

<llo_original>
// kernel: tpu_custom_call.1
$region0: #{tpu_custom_call.1}
  #allocation0 [shape = 'u32[]', space=smem, size = 0x4, offset = 0x4, fixed_abs, tag = 'smem constant byte address 0x4 - core index']
  #allocation1 [shape = 'u32[144,128]{1,0:T(1,128)}', space=vmem, size = 0x12000, scoped, tag = 'internal scratch']
  %s0 = inlined_call_operand.vmem [shape: f32[13,768], index: 0, kind: input, shape index: {}]
  %s1 = inlined_call_operand.vmem [shape: f32[13,768], index: 1, kind: input, shape index: {}]
  %s2 = inlined_call_operand.vmem [shape: f32[768,64], index: 2, kind: input, shape index: {}]
  %s3 = inlined_call_operand.vmem [shape: f32[1,64], index: 3, kind: input, shape index: {}]
  %s4 = inlined_call_operand.vmem [shape: f32[13,1], index: 4, kind: output, shape index: {}]
  %s5 = sld [smem:[#allocation0]]
  $region49: #{tpu_custom_call.1} parent=0
    _
  %s7 = ssub.s32 1, %s5
  %s8 = scalar_select 0, %s7, %s5
  loop: start=0, step=1, limit=4
  $region2: #{tpu_custom_call.1} parent=0 // loop_pre_header
    _
  $region3: #{tpu_custom_call.1} parent=0 // loop_header
    %s10 = sphi 0, %s14
    %p11 = scmp.ge.s32.totalorder %s10, 4
    %s20 = sphi 0, %s22
    %s23 = sphi 0, %s20
    %s24 = sphi 0, %s23
    %s40 = sphi 0, %s24
    %s46 = sphi 0, %s48
    %s49 = sphi 0, %s46
    %s50 = sphi 0, %s49
    %s66 = sphi 0, %s50
    %s70 = sphi 0, %s70
    %s72 = sphi 0, %s70
    %s73 = sphi 0, %s72
    %s87 = sphi 0, %s73
    %s91 = sphi 0, %s91
    %s93 = sphi 0, %s91
    %s94 = sphi 0, %s93
    %s108 = sphi 0, %s94
    %s114 = sphi 0, %s116
    %s117 = sphi 0, %s114
    %s118 = sphi 0, %s117
    %s134 = sphi 0, %s118
  $region4: #{tpu_custom_call.1} parent=0 // loop_header_branch
    %13 = sbr.rel (%p11) target = $region8
  $region5: #{tpu_custom_call.1} parent=0 // loop_body
    %s15 = ssub.s32 %s10, 1
    %s16 = ssub.s32 %s10, 2
    %s17 = sadd.s32 %s10, 1
    %s18 = ssub.s32 %s10, %s17
    %p19 = scmp.eq.s32.totalorder %s18, 0
    %s21 = sadd.s32 %s20, 1
    %s22 = scalar_select %p19, %s20, %s21
    %p25 = pneg %p19
    %p26 = scmp.eq.s32.totalorder %s10, 1
    %p27 = por %p25, %p26
    %p28 = scmp.ne.s32.totalorder %s20, %s23
    %p29 = scmp.eq.s32.totalorder %s10, 0
    %p30 = por %p28, %p29
    %p31 = scmp.ne.s32.totalorder %s20, %s23
    %p32 = scmp.eq.s32.totalorder %s15, 1
    %p33 = por %p31, %p32
    %p34 = scmp.ne.s32.totalorder %s23, %s24
    %p35 = scmp.eq.s32.totalorder %s15, 0
    %p36 = por %p34, %p35
    %p37 = scmp.ne.s32.totalorder %s23, %s24
    %p38 = scmp.eq.s32.totalorder %s16, 1
    %p39 = por %p37, %p38
    %p41 = scmp.ne.s32.totalorder %s24, %s40
    %p42 = scmp.eq.s32.totalorder %s16, 0
    %p43 = por %p41, %p42
    %s44 = ssub.s32 %s10, %s17
    %p45 = scmp.eq.s32.totalorder %s44, 0
    %s47 = sadd.s32 %s46, 1
    %s48 = scalar_select %p45, %s46, %s47
    %p51 = pneg %p45
    %p52 = scmp.eq.s32.totalorder %s10, 1
    %p53 = por %p51, %p52
    %p54 = scmp.ne.s32.totalorder %s46, %s49
    %p55 = scmp.eq.s32.totalorder %s10, 0
    %p56 = por %p54, %p55
    %p57 = scmp.ne.s32.totalorder %s46, %s49
    %p58 = scmp.eq.s32.totalorder %s15, 1
    %p59 = por %p57, %p58
    %p60 = scmp.ne.s32.totalorder %s49, %s50
    %p61 = scmp.eq.s32.totalorder %s15, 0
    %p62 = por %p60, %p61
    %p63 = scmp.ne.s32.totalorder %s49, %s50
    %p64 = scmp.eq.s32.totalorder %s16, 1
    %p65 = por %p63, %p64
    %p67 = scmp.ne.s32.totalorder %s50, %s66
    %p68 = scmp.eq.s32.totalorder %s16, 0
    %p69 = por %p67, %p68
    %s71 = sadd.s32 %s70, 1
    %p74 = scmp.eq.s32.totalorder %s10, 1
    %p75 = scmp.ne.s32.totalorder %s70, %s72
    %p76 = scmp.eq.s32.totalorder %s10, 0
    %p77 = por %p75, %p76
    %p78 = scmp.ne.s32.totalorder %s70, %s72
    %p79 = scmp.eq.s32.totalorder %s15, 1
    %p80 = por %p78, %p79
    %p81 = scmp.ne.s32.totalorder %s72, %s73
    %p82 = scmp.eq.s32.totalorder %s15, 0
    %p83 = por %p81, %p82
    %p84 = scmp.ne.s32.totalorder %s72, %s73
    %p85 = scmp.eq.s32.totalorder %s16, 1
    %p86 = por %p84, %p85
    %p88 = scmp.ne.s32.totalorder %s73, %s87
    %p89 = scmp.eq.s32.totalorder %s16, 0
    %p90 = por %p88, %p89
    %s92 = sadd.s32 %s91, 1
    %p95 = scmp.eq.s32.totalorder %s10, 1
    %p96 = scmp.ne.s32.totalorder %s91, %s93
    %p97 = scmp.eq.s32.totalorder %s10, 0
    %p98 = por %p96, %p97
    %p99 = scmp.ne.s32.totalorder %s91, %s93
    %p100 = scmp.eq.s32.totalorder %s15, 1
    %p101 = por %p99, %p100
    %p102 = scmp.ne.s32.totalorder %s93, %s94
    %p103 = scmp.eq.s32.totalorder %s15, 0
    %p104 = por %p102, %p103
    %p105 = scmp.ne.s32.totalorder %s93, %s94
    %p106 = scmp.eq.s32.totalorder %s16, 1
    %p107 = por %p105, %p106
    %p109 = scmp.ne.s32.totalorder %s94, %s108
    %p110 = scmp.eq.s32.totalorder %s16, 0
    %p111 = por %p109, %p110
    %s112 = ssub.s32 %s10, %s17
    %p113 = scmp.eq.s32.totalorder %s112, 0
    %s115 = sadd.s32 %s114, 1
    %s116 = scalar_select %p113, %s114, %s115
    %p119 = pneg %p113
    %p120 = scmp.eq.s32.totalorder %s10, 1
    %p121 = por %p119, %p120
    %p122 = scmp.ne.s32.totalorder %s114, %s117
    %p123 = scmp.eq.s32.totalorder %s10, 0
    %p124 = por %p122, %p123
    %p125 = scmp.ne.s32.totalorder %s114, %s117
    %p126 = scmp.eq.s32.totalorder %s15, 1
    %p127 = por %p125, %p126
    %p128 = scmp.ne.s32.totalorder %s117, %s118
    %p129 = scmp.eq.s32.totalorder %s15, 0
    %p130 = por %p128, %p129
    %p131 = scmp.ne.s32.totalorder %s117, %s118
    %p132 = scmp.eq.s32.totalorder %s16, 1
    %p133 = por %p131, %p132
    %p135 = scmp.ne.s32.totalorder %s118, %s134
    %p136 = scmp.eq.s32.totalorder %s16, 0
    %p137 = por %p135, %p136
    %p138 = scmp.le.s32.totalorder 1, %s10
    %p139 = scmp.lt.s32.totalorder %s10, 3
    %p140 = pnand %p138, %p139
    %p141 = pneg %p140
    // Predicated region
    $region9: #{tpu_custom_call.1} parent=5 // pred_check
      _
    $region10: #{tpu_custom_call.1} parent=5 // pred_check_branch
      %143 = sbr.rel (%p140) target = $region12
    $region11: #{tpu_custom_call.1} parent=5 // pred_region
      %s144 = ssub.s32 %s10, 1
      // Predicated region
      $region13: #{tpu_custom_call.1} parent=11 // pred_check
        %p145 = pneg %p83
      $region14: #{tpu_custom_call.1} parent=11 // pred_check_branch
        %147 = sbr.rel (%p145) target = $region16
      $region15: #{tpu_custom_call.1} parent=11 // pred_region
        _
      $region16: #{tpu_custom_call.1} parent=11 // pred_fallthru
        _
      // Predicated region
      $region17: #{tpu_custom_call.1} parent=11 // pred_check
        %p148 = pneg %p104
      $region18: #{tpu_custom_call.1} parent=11 // pred_check_branch
        %150 = sbr.rel (%p148) target = $region20
      $region19: #{tpu_custom_call.1} parent=11 // pred_region
        _
      $region20: #{tpu_custom_call.1} parent=11 // pred_fallthru
        _
    $region12: #{tpu_custom_call.1} parent=5 // pred_fallthru
      _
    %p151 = scmp.lt.s32.totalorder %s10, 2
    // Predicated region
    $region21: #{tpu_custom_call.1} parent=5 // pred_check
      %p152 = pneg %p151
    $region22: #{tpu_custom_call.1} parent=5 // pred_check_branch
      %154 = sbr.rel (%p152) target = $region24
    $region23: #{tpu_custom_call.1} parent=5 // pred_region
      // Predicated region
      $region25: #{tpu_custom_call.1} parent=23 // pred_check
        %p155 = pneg %p30
      $region26: #{tpu_custom_call.1} parent=23 // pred_check_branch
        %157 = sbr.rel (%p155) target = $region28
      $region27: #{tpu_custom_call.1} parent=23 // pred_region
        %p158 = scmp.lt.s32.totalorder %s10, 1
        %s159 = scalar_select %p158, %s10, 1
        %s160 = smul.addr %s159, 6
        %s161 = smul.addr %s160, 8
        %s162 = scalar_lea.vmem %s0, %s161
      $region28: #{tpu_custom_call.1} parent=23 // pred_fallthru
        _
      // Predicated region
      $region29: #{tpu_custom_call.1} parent=23 // pred_check
        %p163 = pneg %p56
      $region30: #{tpu_custom_call.1} parent=23 // pred_check_branch
        %165 = sbr.rel (%p163) target = $region32
      $region31: #{tpu_custom_call.1} parent=23 // pred_region
        %p166 = scmp.lt.s32.totalorder %s10, 1
        %s167 = scalar_select %p166, %s10, 1
        %s168 = smul.addr %s167, 6
        %s169 = smul.addr %s168, 8
        %s170 = scalar_lea.vmem %s1, %s169
      $region32: #{tpu_custom_call.1} parent=23 // pred_fallthru
        _
    $region24: #{tpu_custom_call.1} parent=5 // pred_fallthru
      _
    %p171 = scmp.le.s32.totalorder 1, %s10
    %p172 = scmp.lt.s32.totalorder %s10, 3
    %p173 = pnand %p171, %p172
    %p174 = pneg %p173
    // Predicated region
    $region33: #{tpu_custom_call.1} parent=5 // pred_check
      _
    $region34: #{tpu_custom_call.1} parent=5 // pred_check_branch
      %176 = sbr.rel (%p173) target = $region36
    $region35: #{tpu_custom_call.1} parent=5 // pred_region
      %s177 = ssub.s32 %s10, 1
      %p178 = scmp.lt.s32.totalorder %s15, 1
      %s179 = scalar_select %p178, %s15, 1
      %s180 = smul.addr %s179, 6
      %s181 = smul.addr %s180, 8
      %s182 = scalar_lea.vmem %s0, %s181
      %p183 = pneg %p36
      %p184 = pneg %p33
      %p185 = scmp.lt.s32.totalorder %s15, 1
      %s186 = scalar_select %p185, %s15, 1
      %s187 = smul.addr %s186, 6
      %s188 = smul.addr %s187, 8
      %s189 = scalar_lea.vmem %s1, %s188
      %p190 = pneg %p62
      %p191 = pneg %p59
      %p192 = pneg %p83
      %p193 = pneg %p80
      %p194 = pneg %p104
      %p195 = pneg %p101
      %p196 = pneg %p130
      %p197 = pneg %p127
      %p198 = scmp.lt.s32.totalorder %s15, 1
      %s199 = scalar_select %p198, %s15, 1
      %s200 = smul.addr %s199, 8
      %s201 = scalar_lea.vmem %s4, %s200
      %p202 = scmp.lt.s32.totalorder %s15, 1
      %s203 = scalar_select %p202, %s15, 1
      %s204 = smul.addr %s203, 6
      %s205 = smul.addr %s204, 8
      %s206 = scalar_lea.vmem %s0, %s205
      %p207 = scmp.lt.s32.totalorder %s15, 1
      %s208 = scalar_select %p207, %s15, 1
      %s209 = smul.addr %s208, 6
      %s210 = smul.addr %s209, 8
      %s211 = scalar_lea.vmem %s1, %s210
      %p212 = scmp.lt.s32.totalorder %s15, 1
      %s213 = scalar_select %p212, %s15, 1
      %s214 = smul.addr %s213, 8
      %s215 = scalar_lea.vmem %s4, %s214
      %v216 = vld [vmem:[%s2] sm:$0xff]
      %v217 = vld [vmem:[%s2 + $0x8] sm:$0xff]
      %v218 = vld [vmem:[%s2 + $0x10] sm:$0xff]
      %v219 = vld [vmem:[%s2 + $0x18] sm:$0xff]
      %v220 = vld [vmem:[%s2 + $0x20] sm:$0xff]
      %v221 = vld [vmem:[%s2 + $0x28] sm:$0xff]
      %v222 = vld [vmem:[%s2 + $0x30] sm:$0xff]
      %v223 = vld [vmem:[%s2 + $0x38] sm:$0xff]
      %v224 = vld [vmem:[%s2 + $0x40] sm:$0xff]
      %v225 = vld [vmem:[%s2 + $0x48] sm:$0xff]
      %v226 = vld [vmem:[%s2 + $0x50] sm:$0xff]
      %v227 = vld [vmem:[%s2 + $0x58] sm:$0xff]
      %v228 = vld [vmem:[%s2 + $0x60] sm:$0xff]
      %v229 = vld [vmem:[%s2 + $0x68] sm:$0xff]
      %v230 = vld [vmem:[%s2 + $0x70] sm:$0xff]
      %v231 = vld [vmem:[%s2 + $0x78] sm:$0xff]
      %v232 = vld [vmem:[%s2 + $0x80] sm:$0xff]
      %v233 = vld [vmem:[%s2 + $0x88] sm:$0xff]
      %v234 = vld [vmem:[%s2 + $0x90] sm:$0xff]
      %v235 = vld [vmem:[%s2 + $0x98] sm:$0xff]
      %v236 = vld [vmem:[%s2 + $0xa0] sm:$0xff]
      %v237 = vld [vmem:[%s2 + $0xa8] sm:$0xff]
      %v238 = vld [vmem:[%s2 + $0xb0] sm:$0xff]
      %v239 = vld [vmem:[%s2 + $0xb8] sm:$0xff]
      %v240 = vld [vmem:[%s2 + $0xc0] sm:$0xff]
      %v241 = vld [vmem:[%s2 + $0xc8] sm:$0xff]
      %v242 = vld [vmem:[%s2 + $0xd0] sm:$0xff]
      %v243 = vld [vmem:[%s2 + $0xd8] sm:$0xff]
      %v244 = vld [vmem:[%s2 + $0xe0] sm:$0xff]
      %v245 = vld [vmem:[%s2 + $0xe8] sm:$0xff]
      %v246 = vld [vmem:[%s2 + $0xf0] sm:$0xff]
      %v247 = vld [vmem:[%s2 + $0xf8] sm:$0xff]
      %v248 = vld [vmem:[%s2 + $0x100] sm:$0xff]
      %v249 = vld [vmem:[%s2 + $0x108] sm:$0xff]
      %v250 = vld [vmem:[%s2 + $0x110] sm:$0xff]
      %v251 = vld [vmem:[%s2 + $0x118] sm:$0xff]
      %v252 = vld [vmem:[%s2 + $0x120] sm:$0xff]
      %v253 = vld [vmem:[%s2 + $0x128] sm:$0xff]
      %v254 = vld [vmem:[%s2 + $0x130] sm:$0xff]
      %v255 = vld [vmem:[%s2 + $0x138] sm:$0xff]
      %v256 = vld [vmem:[%s2 + $0x140] sm:$0xff]
      %v257 = vld [vmem:[%s2 + $0x148] sm:$0xff]
      %v258 = vld [vmem:[%s2 + $0x150] sm:$0xff]
      %v259 = vld [vmem:[%s2 + $0x158] sm:$0xff]
      %v260 = vld [vmem:[%s2 + $0x160] sm:$0xff]
      %v261 = vld [vmem:[%s2 + $0x168] sm:$0xff]
      %v262 = vld [vmem:[%s2 + $0x170] sm:$0xff]
      %v263 = vld [vmem:[%s2 + $0x178] sm:$0xff]
      %v264 = vld [vmem:[%s2 + $0x180] sm:$0xff]
      %v265 = vld [vmem:[%s2 + $0x188] sm:$0xff]
      %v266 = vld [vmem:[%s2 + $0x190] sm:$0xff]
      %v267 = vld [vmem:[%s2 + $0x198] sm:$0xff]
      %v268 = vld [vmem:[%s2 + $0x1a0] sm:$0xff]
      %v269 = vld [vmem:[%s2 + $0x1a8] sm:$0xff]
      %v270 = vld [vmem:[%s2 + $0x1b0] sm:$0xff]
      %v271 = vld [vmem:[%s2 + $0x1b8] sm:$0xff]
      %v272 = vld [vmem:[%s2 + $0x1c0] sm:$0xff]
      %v273 = vld [vmem:[%s2 + $0x1c8] sm:$0xff]
      %v274 = vld [vmem:[%s2 + $0x1d0] sm:$0xff]
      %v275 = vld [vmem:[%s2 + $0x1d8] sm:$0xff]
      %v276 = vld [vmem:[%s2 + $0x1e0] sm:$0xff]
      %v277 = vld [vmem:[%s2 + $0x1e8] sm:$0xff]
      %v278 = vld [vmem:[%s2 + $0x1f0] sm:$0xff]
      %v279 = vld [vmem:[%s2 + $0x1f8] sm:$0xff]
      %v280 = vld [vmem:[%s2 + $0x200] sm:$0xff]
      %v281 = vld [vmem:[%s2 + $0x208] sm:$0xff]
      %v282 = vld [vmem:[%s2 + $0x210] sm:$0xff]
      %v283 = vld [vmem:[%s2 + $0x218] sm:$0xff]
      %v284 = vld [vmem:[%s2 + $0x220] sm:$0xff]
      %v285 = vld [vmem:[%s2 + $0x228] sm:$0xff]
      %v286 = vld [vmem:[%s2 + $0x230] sm:$0xff]
      %v287 = vld [vmem:[%s2 + $0x238] sm:$0xff]
      %v288 = vld [vmem:[%s2 + $0x240] sm:$0xff]
      %v289 = vld [vmem:[%s2 + $0x248] sm:$0xff]
      %v290 = vld [vmem:[%s2 + $0x250] sm:$0xff]
      %v291 = vld [vmem:[%s2 + $0x258] sm:$0xff]
      %v292 = vld [vmem:[%s2 + $0x260] sm:$0xff]
      %v293 = vld [vmem:[%s2 + $0x268] sm:$0xff]
      %v294 = vld [vmem:[%s2 + $0x270] sm:$0xff]
      %v295 = vld [vmem:[%s2 + $0x278] sm:$0xff]
      %v296 = vld [vmem:[%s2 + $0x280] sm:$0xff]
      %v297 = vld [vmem:[%s2 + $0x288] sm:$0xff]
      %v298 = vld [vmem:[%s2 + $0x290] sm:$0xff]
      %v299 = vld [vmem:[%s2 + $0x298] sm:$0xff]
      %v300 = vld [vmem:[%s2 + $0x2a0] sm:$0xff]
      %v301 = vld [vmem:[%s2 + $0x2a8] sm:$0xff]
      %v302 = vld [vmem:[%s2 + $0x2b0] sm:$0xff]
      %v303 = vld [vmem:[%s2 + $0x2b8] sm:$0xff]
      %v304 = vld [vmem:[%s2 + $0x2c0] sm:$0xff]
      %v305 = vld [vmem:[%s2 + $0x2c8] sm:$0xff]
      %v306 = vld [vmem:[%s2 + $0x2d0] sm:$0xff]
      %v307 = vld [vmem:[%s2 + $0x2d8] sm:$0xff]
      %v308 = vld [vmem:[%s2 + $0x2e0] sm:$0xff]
      %v309 = vld [vmem:[%s2 + $0x2e8] sm:$0xff]
      %v310 = vld [vmem:[%s2 + $0x2f0] sm:$0xff]
      %v311 = vld [vmem:[%s2 + $0x2f8] sm:$0xff]
      %v312 = vld [vmem:[%s3] sm:$0x1]
      %v313 = vld [vmem:[%s206] sm:$0xff]
      %v314 = vld [vmem:[%s206 + $0x8] sm:$0xff]
      %v315 = vld [vmem:[%s206 + $0x10] sm:$0xff]
      %v316 = vld [vmem:[%s206 + $0x18] sm:$0xff]
      %v317 = vld [vmem:[%s206 + $0x20] sm:$0xff]
      %v318 = vld [vmem:[%s206 + $0x28] sm:$0xff]
      %v319 = vld [vmem:[%s211] sm:$0xff]
      %v320 = vld [vmem:[%s211 + $0x8] sm:$0xff]
      %v321 = vld [vmem:[%s211 + $0x10] sm:$0xff]
      %v322 = vld [vmem:[%s211 + $0x18] sm:$0xff]
      %v323 = vld [vmem:[%s211 + $0x20] sm:$0xff]
      %v324 = vld [vmem:[%s211 + $0x28] sm:$0xff]
      %v326 = vlaneseq
      %v327 = vshrl.u32 %v326, 7
      %v328 = vsub.s32 0, %v327
      %v329 = vrot.slane %v312, %v328
      %331 = vmatprep.subr.mxu0 0.0
      %332 = vmatpush1.msra.mxu0 %v216
      %333 = vmatprep.subr.mxu0 0.0
      %334 = vmatpush1.msra.mxu0 %v217
      %335 = vmatprep.subr.mxu0 0.0
      %336 = vmatpush1.msra.mxu0 %v218
      %337 = vmatprep.subr.mxu0 0.0
      %338 = vmatpush1.msra.mxu0 %v219
      %339 = vmatprep.subr.mxu0 0.0
      %340 = vmatpush1.msra.mxu0 %v220
      %341 = vmatprep.subr.mxu0 0.0
      %342 = vmatpush1.msra.mxu0 %v221
      %343 = vmatprep.subr.mxu0 0.0
      %344 = vmatpush1.msra.mxu0 %v222
      %345 = vmatprep.subr.mxu0 0.0
      %346 = vmatpush1.msra.mxu0 %v223
      %347 = vmatprep.subr.mxu0 0.0
      %348 = vmatpush1.msra.mxu0 %v224
      %349 = vmatprep.subr.mxu0 0.0
      %350 = vmatpush1.msra.mxu0 %v225
      %351 = vmatprep.subr.mxu0 0.0
      %352 = vmatpush1.msra.mxu0 %v226
      %353 = vmatprep.subr.mxu0 0.0
      %354 = vmatpush1.msra.mxu0 %v227
      %355 = vmatprep.subr.mxu0 0.0
      %356 = vmatpush1.msra.mxu0 %v228
      %357 = vmatprep.subr.mxu0 0.0
      %358 = vmatpush1.msra.mxu0 %v229
      %359 = vmatprep.subr.mxu0 0.0
      %360 = vmatpush1.msra.mxu0 %v230
      %361 = vmatprep.subr.mxu0 0.0
      %362 = vmatpush1.msra.mxu0 %v231
      %363 = vmatprep.subr.mxu0 0.0
      %364 = vmatpush1.msra.mxu0 %v232
      %365 = vmatprep.subr.mxu0 0.0
      %366 = vmatpush1.msra.mxu0 %v233
      %367 = vmatprep.subr.mxu0 0.0
      %368 = vmatpush1.msra.mxu0 %v234
      %369 = vmatprep.subr.mxu0 0.0
      %370 = vmatpush1.msra.mxu0 %v235
      %371 = vmatprep.subr.mxu0 0.0
      %372 = vmatpush1.msra.mxu0 %v236
      %373 = vmatprep.subr.mxu0 0.0
      %374 = vmatpush1.msra.mxu0 %v237
      %375 = vmatprep.subr.mxu0 0.0
      %376 = vmatpush1.msra.mxu0 %v238
      %377 = vmatprep.subr.mxu0 0.0
      %378 = vmatpush1.msra.mxu0 %v239
      %379 = vmatprep.subr.mxu0 0.0
      %380 = vmatpush1.msra.mxu0 %v240
      %381 = vmatprep.subr.mxu0 0.0
      %382 = vmatpush1.msra.mxu0 %v241
      %383 = vmatprep.subr.mxu0 0.0
      %384 = vmatpush1.msra.mxu0 %v242
      %385 = vmatprep.subr.mxu0 0.0
      %386 = vmatpush1.msra.mxu0 %v243
      %387 = vmatprep.subr.mxu0 0.0
      %388 = vmatpush1.msra.mxu0 %v244
      %389 = vmatprep.subr.mxu0 0.0
      %390 = vmatpush1.msra.mxu0 %v245
      %391 = vmatprep.subr.mxu0 0.0
      %392 = vmatpush1.msra.mxu0 %v246
      %393 = vmatprep.subr.mxu0 0.0
      %394 = vmatpush1.msra.mxu0 %v247
      %395 = vmatprep.mubr.f32.mxu0 %v314
      %396 = vmatmul.mubr.f32.gmra.mrb[0].mxu0 %v313
      %v397 = vpop.f32.mrb[0].mxu0
      %v398 = vadd.f32 %v329, %v397
      %v399 = vpop.f32.mrb[0].mxu0
      %400 = vdwg.mxu0
      %401 = vmatprep.subr.mxu0 0.0
      %402 = vmatpush1.msra.mxu0 %v248
      %403 = vmatprep.subr.mxu0 0.0
      %404 = vmatpush1.msra.mxu0 %v249
      %405 = vmatprep.subr.mxu0 0.0
      %406 = vmatpush1.msra.mxu0 %v250
      %407 = vmatprep.subr.mxu0 0.0
      %408 = vmatpush1.msra.mxu0 %v251
      %409 = vmatprep.subr.mxu0 0.0
      %410 = vmatpush1.msra.mxu0 %v252
      %411 = vmatprep.subr.mxu0 0.0
      %412 = vmatpush1.msra.mxu0 %v253
      %413 = vmatprep.subr.mxu0 0.0
      %414 = vmatpush1.msra.mxu0 %v254
      %415 = vmatprep.subr.mxu0 0.0
      %416 = vmatpush1.msra.mxu0 %v255
      %417 = vmatprep.subr.mxu0 0.0
      %418 = vmatpush1.msra.mxu0 %v256
      %419 = vmatprep.subr.mxu0 0.0
      %420 = vmatpush1.msra.mxu0 %v257
      %421 = vmatprep.subr.mxu0 0.0
      %422 = vmatpush1.msra.mxu0 %v258
      %423 = vmatprep.subr.mxu0 0.0
      %424 = vmatpush1.msra.mxu0 %v259
      %425 = vmatprep.subr.mxu0 0.0
      %426 = vmatpush1.msra.mxu0 %v260
      %427 = vmatprep.subr.mxu0 0.0
      %428 = vmatpush1.msra.mxu0 %v261
      %429 = vmatprep.subr.mxu0 0.0
      %430 = vmatpush1.msra.mxu0 %v262
      %431 = vmatprep.subr.mxu0 0.0
      %432 = vmatpush1.msra.mxu0 %v263
      %433 = vmatprep.subr.mxu0 0.0
      %434 = vmatpush1.msra.mxu0 %v264
      %435 = vmatprep.subr.mxu0 0.0
      %436 = vmatpush1.msra.mxu0 %v265
      %437 = vmatprep.subr.mxu0 0.0
      %438 = vmatpush1.msra.mxu0 %v266
      %439 = vmatprep.subr.mxu0 0.0
      %440 = vmatpush1.msra.mxu0 %v267
      %441 = vmatprep.subr.mxu0 0.0
      %442 = vmatpush1.msra.mxu0 %v268
      %443 = vmatprep.subr.mxu0 0.0
      %444 = vmatpush1.msra.mxu0 %v269
      %445 = vmatprep.subr.mxu0 0.0
      %446 = vmatpush1.msra.mxu0 %v270
      %447 = vmatprep.subr.mxu0 0.0
      %448 = vmatpush1.msra.mxu0 %v271
      %449 = vmatprep.subr.mxu0 0.0
      %450 = vmatpush1.msra.mxu0 %v272
      %451 = vmatprep.subr.mxu0 0.0
      %452 = vmatpush1.msra.mxu0 %v273
      %453 = vmatprep.subr.mxu0 0.0
      %454 = vmatpush1.msra.mxu0 %v274
      %455 = vmatprep.subr.mxu0 0.0
      %456 = vmatpush1.msra.mxu0 %v275
      %457 = vmatprep.subr.mxu0 0.0
      %458 = vmatpush1.msra.mxu0 %v276
      %459 = vmatprep.subr.mxu0 0.0
      %460 = vmatpush1.msra.mxu0 %v277
      %461 = vmatprep.subr.mxu0 0.0
      %462 = vmatpush1.msra.mxu0 %v278
      %463 = vmatprep.subr.mxu0 0.0
      %464 = vmatpush1.msra.mxu0 %v279
      %465 = vmatprep.mubr.f32.mxu0 %v316
      %466 = vmatmul.mubr.f32.gmra.mrb[0].mxu0 %v315
      %v467 = vpop.f32.mrb[0].mxu0
      %v468 = vadd.f32 %v398, %v467
      %v469 = vpop.f32.mrb[0].mxu0
      %470 = vdwg.mxu0
      %471 = vmatprep.subr.mxu0 0.0
      %472 = vmatpush1.msra.mxu0 %v280
      %473 = vmatprep.subr.mxu0 0.0
      %474 = vmatpush1.msra.mxu0 %v281
      %475 = vmatprep.subr.mxu0 0.0
      %476 = vmatpush1.msra.mxu0 %v282
      %477 = vmatprep.subr.mxu0 0.0
      %478 = vmatpush1.msra.mxu0 %v283
      %479 = vmatprep.subr.mxu0 0.0
      %480 = vmatpush1.msra.mxu0 %v284
      %481 = vmatprep.subr.mxu0 0.0
      %482 = vmatpush1.msra.mxu0 %v285
      %483 = vmatprep.subr.mxu0 0.0
      %484 = vmatpush1.msra.mxu0 %v286
      %485 = vmatprep.subr.mxu0 0.0
      %486 = vmatpush1.msra.mxu0 %v287
      %487 = vmatprep.subr.mxu0 0.0
      %488 = vmatpush1.msra.mxu0 %v288
      %489 = vmatprep.subr.mxu0 0.0
      %490 = vmatpush1.msra.mxu0 %v289
      %491 = vmatprep.subr.mxu0 0.0
      %492 = vmatpush1.msra.mxu0 %v290
      %493 = vmatprep.subr.mxu0 0.0
      %494 = vmatpush1.msra.mxu0 %v291
      %495 = vmatprep.subr.mxu0 0.0
      %496 = vmatpush1.msra.mxu0 %v292
      %497 = vmatprep.subr.mxu0 0.0
      %498 = vmatpush1.msra.mxu0 %v293
      %499 = vmatprep.subr.mxu0 0.0
      %500 = vmatpush1.msra.mxu0 %v294
      %501 = vmatprep.subr.mxu0 0.0
      %502 = vmatpush1.msra.mxu0 %v295
      %503 = vmatprep.subr.mxu0 0.0
      %504 = vmatpush1.msra.mxu0 %v296
      %505 = vmatprep.subr.mxu0 0.0
      %506 = vmatpush1.msra.mxu0 %v297
      %507 = vmatprep.subr.mxu0 0.0
      %508 = vmatpush1.msra.mxu0 %v298
      %509 = vmatprep.subr.mxu0 0.0
      %510 = vmatpush1.msra.mxu0 %v299
      %511 = vmatprep.subr.mxu0 0.0
      %512 = vmatpush1.msra.mxu0 %v300
      %513 = vmatprep.subr.mxu0 0.0
      %514 = vmatpush1.msra.mxu0 %v301
      %515 = vmatprep.subr.mxu0 0.0
      %516 = vmatpush1.msra.mxu0 %v302
      %517 = vmatprep.subr.mxu0 0.0
      %518 = vmatpush1.msra.mxu0 %v303
      %519 = vmatprep.subr.mxu0 0.0
      %520 = vmatpush1.msra.mxu0 %v304
      %521 = vmatprep.subr.mxu0 0.0
      %522 = vmatpush1.msra.mxu0 %v305
      %523 = vmatprep.subr.mxu0 0.0
      %524 = vmatpush1.msra.mxu0 %v306
      %525 = vmatprep.subr.mxu0 0.0
      %526 = vmatpush1.msra.mxu0 %v307
      %527 = vmatprep.subr.mxu0 0.0
      %528 = vmatpush1.msra.mxu0 %v308
      %529 = vmatprep.subr.mxu0 0.0
      %530 = vmatpush1.msra.mxu0 %v309
      %531 = vmatprep.subr.mxu0 0.0
      %532 = vmatpush1.msra.mxu0 %v310
      %533 = vmatprep.subr.mxu0 0.0
      %534 = vmatpush1.msra.mxu0 %v311
      %535 = vmatprep.mubr.f32.mxu0 %v318
      %536 = vmatmul.mubr.f32.gmra.mrb[0].mxu0 %v317
      %v537 = vpop.f32.mrb[0].mxu0
      %v538 = vadd.f32 %v468, %v537
      %v539 = vpop.f32.mrb[0].mxu0
      %540 = vdwg.mxu0
      %541 = vmatprep.subr.mxu0 0.0
      %542 = vmatpush1.msra.mxu0 %v216
      %543 = vmatprep.subr.mxu0 0.0
      %544 = vmatpush1.msra.mxu0 %v217
      %545 = vmatprep.subr.mxu0 0.0
      %546 = vmatpush1.msra.mxu0 %v218
      %547 = vmatprep.subr.mxu0 0.0
      %548 = vmatpush1.msra.mxu0 %v219
      %549 = vmatprep.subr.mxu0 0.0
      %550 = vmatpush1.msra.mxu0 %v220
      %551 = vmatprep.subr.mxu0 0.0
      %552 = vmatpush1.msra.mxu0 %v221
      %553 = vmatprep.subr.mxu0 0.0
      %554 = vmatpush1.msra.mxu0 %v222
      %555 = vmatprep.subr.mxu0 0.0
      %556 = vmatpush1.msra.mxu0 %v223
      %557 = vmatprep.subr.mxu0 0.0
      %558 = vmatpush1.msra.mxu0 %v224
      %559 = vmatprep.subr.mxu0 0.0
      %560 = vmatpush1.msra.mxu0 %v225
      %561 = vmatprep.subr.mxu0 0.0
      %562 = vmatpush1.msra.mxu0 %v226
      %563 = vmatprep.subr.mxu0 0.0
      %564 = vmatpush1.msra.mxu0 %v227
      %565 = vmatprep.subr.mxu0 0.0
      %566 = vmatpush1.msra.mxu0 %v228
      %567 = vmatprep.subr.mxu0 0.0
      %568 = vmatpush1.msra.mxu0 %v229
      %569 = vmatprep.subr.mxu0 0.0
      %570 = vmatpush1.msra.mxu0 %v230
      %571 = vmatprep.subr.mxu0 0.0
      %572 = vmatpush1.msra.mxu0 %v231
      %573 = vmatprep.subr.mxu0 0.0
      %574 = vmatpush1.msra.mxu0 %v232
      %575 = vmatprep.subr.mxu0 0.0
      %576 = vmatpush1.msra.mxu0 %v233
      %577 = vmatprep.subr.mxu0 0.0
      %578 = vmatpush1.msra.mxu0 %v234
      %579 = vmatprep.subr.mxu0 0.0
      %580 = vmatpush1.msra.mxu0 %v235
      %581 = vmatprep.subr.mxu0 0.0
      %582 = vmatpush1.msra.mxu0 %v236
      %583 = vmatprep.subr.mxu0 0.0
      %584 = vmatpush1.msra.mxu0 %v237
      %585 = vmatprep.subr.mxu0 0.0
      %586 = vmatpush1.msra.mxu0 %v238
      %587 = vmatprep.subr.mxu0 0.0
      %588 = vmatpush1.msra.mxu0 %v239
      %589 = vmatprep.subr.mxu0 0.0
      %590 = vmatpush1.msra.mxu0 %v240
      %591 = vmatprep.subr.mxu0 0.0
      %592 = vmatpush1.msra.mxu0 %v241
      %593 = vmatprep.subr.mxu0 0.0
      %594 = vmatpush1.msra.mxu0 %v242
      %595 = vmatprep.subr.mxu0 0.0
      %596 = vmatpush1.msra.mxu0 %v243
      %597 = vmatprep.subr.mxu0 0.0
      %598 = vmatpush1.msra.mxu0 %v244
      %599 = vmatprep.subr.mxu0 0.0
      %600 = vmatpush1.msra.mxu0 %v245
      %601 = vmatprep.subr.mxu0 0.0
      %602 = vmatpush1.msra.mxu0 %v246
      %603 = vmatprep.subr.mxu0 0.0
      %604 = vmatpush1.msra.mxu0 %v247
      %605 = vmatprep.mubr.f32.mxu0 %v320
      %606 = vmatmul.mubr.f32.gmra.mrb[0].mxu0 %v319
      %v607 = vpop.f32.mrb[0].mxu0
      %v608 = vadd.f32 %v329, %v607
      %v609 = vpop.f32.mrb[0].mxu0
      %610 = vdwg.mxu0
      %611 = vmatprep.subr.mxu0 0.0
      %612 = vmatpush1.msra.mxu0 %v248
      %613 = vmatprep.subr.mxu0 0.0
      %614 = vmatpush1.msra.mxu0 %v249
      %615 = vmatprep.subr.mxu0 0.0
      %616 = vmatpush1.msra.mxu0 %v250
      %617 = vmatprep.subr.mxu0 0.0
      %618 = vmatpush1.msra.mxu0 %v251
      %619 = vmatprep.subr.mxu0 0.0
      %620 = vmatpush1.msra.mxu0 %v252
      %621 = vmatprep.subr.mxu0 0.0
      %622 = vmatpush1.msra.mxu0 %v253
      %623 = vmatprep.subr.mxu0 0.0
      %624 = vmatpush1.msra.mxu0 %v254
      %625 = vmatprep.subr.mxu0 0.0
      %626 = vmatpush1.msra.mxu0 %v255
      %627 = vmatprep.subr.mxu0 0.0
      %628 = vmatpush1.msra.mxu0 %v256
      %629 = vmatprep.subr.mxu0 0.0
      %630 = vmatpush1.msra.mxu0 %v257
      %631 = vmatprep.subr.mxu0 0.0
      %632 = vmatpush1.msra.mxu0 %v258
      %633 = vmatprep.subr.mxu0 0.0
      %634 = vmatpush1.msra.mxu0 %v259
      %635 = vmatprep.subr.mxu0 0.0
      %636 = vmatpush1.msra.mxu0 %v260
      %637 = vmatprep.subr.mxu0 0.0
      %638 = vmatpush1.msra.mxu0 %v261
      %639 = vmatprep.subr.mxu0 0.0
      %640 = vmatpush1.msra.mxu0 %v262
      %641 = vmatprep.subr.mxu0 0.0
      %642 = vmatpush1.msra.mxu0 %v263
      %643 = vmatprep.subr.mxu0 0.0
      %644 = vmatpush1.msra.mxu0 %v264
      %645 = vmatprep.subr.mxu0 0.0
      %646 = vmatpush1.msra.mxu0 %v265
      %647 = vmatprep.subr.mxu0 0.0
      %648 = vmatpush1.msra.mxu0 %v266
      %649 = vmatprep.subr.mxu0 0.0
      %650 = vmatpush1.msra.mxu0 %v267
      %651 = vmatprep.subr.mxu0 0.0
      %652 = vmatpush1.msra.mxu0 %v268
      %653 = vmatprep.subr.mxu0 0.0
      %654 = vmatpush1.msra.mxu0 %v269
      %655 = vmatprep.subr.mxu0 0.0
      %656 = vmatpush1.msra.mxu0 %v270
      %657 = vmatprep.subr.mxu0 0.0
      %658 = vmatpush1.msra.mxu0 %v271
      %659 = vmatprep.subr.mxu0 0.0
      %660 = vmatpush1.msra.mxu0 %v272
      %661 = vmatprep.subr.mxu0 0.0
      %662 = vmatpush1.msra.mxu0 %v273
      %663 = vmatprep.subr.mxu0 0.0
      %664 = vmatpush1.msra.mxu0 %v274
      %665 = vmatprep.subr.mxu0 0.0
      %666 = vmatpush1.msra.mxu0 %v275
      %667 = vmatprep.subr.mxu0 0.0
      %668 = vmatpush1.msra.mxu0 %v276
      %669 = vmatprep.subr.mxu0 0.0
      %670 = vmatpush1.msra.mxu0 %v277
      %671 = vmatprep.subr.mxu0 0.0
      %672 = vmatpush1.msra.mxu0 %v278
      %673 = vmatprep.subr.mxu0 0.0
      %674 = vmatpush1.msra.mxu0 %v279
      %675 = vmatprep.mubr.f32.mxu0 %v322
      %676 = vmatmul.mubr.f32.gmra.mrb[0].mxu0 %v321
      %v677 = vpop.f32.mrb[0].mxu0
      %v678 = vadd.f32 %v608, %v677
      %v679 = vpop.f32.mrb[0].mxu0
      %680 = vdwg.mxu0
      %681 = vmatprep.subr.mxu0 0.0
      %682 = vmatpush1.msra.mxu0 %v280
      %683 = vmatprep.subr.mxu0 0.0
      %684 = vmatpush1.msra.mxu0 %v281
      %685 = vmatprep.subr.mxu0 0.0
      %686 = vmatpush1.msra.mxu0 %v282
      %687 = vmatprep.subr.mxu0 0.0
      %688 = vmatpush1.msra.mxu0 %v283
      %689 = vmatprep.subr.mxu0 0.0
      %690 = vmatpush1.msra.mxu0 %v284
      %691 = vmatprep.subr.mxu0 0.0
      %692 = vmatpush1.msra.mxu0 %v285
      %693 = vmatprep.subr.mxu0 0.0
      %694 = vmatpush1.msra.mxu0 %v286
      %695 = vmatprep.subr.mxu0 0.0
      %696 = vmatpush1.msra.mxu0 %v287
      %697 = vmatprep.subr.mxu0 0.0
      %698 = vmatpush1.msra.mxu0 %v288
      %699 = vmatprep.subr.mxu0 0.0
      %700 = vmatpush1.msra.mxu0 %v289
      %701 = vmatprep.subr.mxu0 0.0
      %702 = vmatpush1.msra.mxu0 %v290
      %703 = vmatprep.subr.mxu0 0.0
      %704 = vmatpush1.msra.mxu0 %v291
      %705 = vmatprep.subr.mxu0 0.0
      %706 = vmatpush1.msra.mxu0 %v292
      %707 = vmatprep.subr.mxu0 0.0
      %708 = vmatpush1.msra.mxu0 %v293
      %709 = vmatprep.subr.mxu0 0.0
      %710 = vmatpush1.msra.mxu0 %v294
      %711 = vmatprep.subr.mxu0 0.0
      %712 = vmatpush1.msra.mxu0 %v295
      %713 = vmatprep.subr.mxu0 0.0
      %714 = vmatpush1.msra.mxu0 %v296
      %715 = vmatprep.subr.mxu0 0.0
      %716 = vmatpush1.msra.mxu0 %v297
      %717 = vmatprep.subr.mxu0 0.0
      %718 = vmatpush1.msra.mxu0 %v298
      %719 = vmatprep.subr.mxu0 0.0
      %720 = vmatpush1.msra.mxu0 %v299
      %721 = vmatprep.subr.mxu0 0.0
      %722 = vmatpush1.msra.mxu0 %v300
      %723 = vmatprep.subr.mxu0 0.0
      %724 = vmatpush1.msra.mxu0 %v301
      %725 = vmatprep.subr.mxu0 0.0
      %726 = vmatpush1.msra.mxu0 %v302
      %727 = vmatprep.subr.mxu0 0.0
      %728 = vmatpush1.msra.mxu0 %v303
      %729 = vmatprep.subr.mxu0 0.0
      %730 = vmatpush1.msra.mxu0 %v304
      %731 = vmatprep.subr.mxu0 0.0
      %732 = vmatpush1.msra.mxu0 %v305
      %733 = vmatprep.subr.mxu0 0.0
      %734 = vmatpush1.msra.mxu0 %v306
      %735 = vmatprep.subr.mxu0 0.0
      %736 = vmatpush1.msra.mxu0 %v307
      %737 = vmatprep.subr.mxu0 0.0
      %738 = vmatpush1.msra.mxu0 %v308
      %739 = vmatprep.subr.mxu0 0.0
      %740 = vmatpush1.msra.mxu0 %v309
      %741 = vmatprep.subr.mxu0 0.0
      %742 = vmatpush1.msra.mxu0 %v310
      %743 = vmatprep.subr.mxu0 0.0
      %744 = vmatpush1.msra.mxu0 %v311
      %745 = vmatprep.mubr.f32.mxu0 %v324
      %746 = vmatmul.mubr.f32.gmra.mrb[0].mxu0 %v323
      %v747 = vpop.f32.mrb[0].mxu0
      %v748 = vadd.f32 %v678, %v747
      %v749 = vpop.f32.mrb[0].mxu0
      %750 = vdwg.mxu0
      %v751 = vmul.f32 %v538, %v748
      %vm752 = vcmask 523264
      %v753 = vsel %vm752, %v751, 0.0
      %754 = vadd.xlane.f32.xlu0 %v753
      %v755 = vpop.xlane.xlu0 %754
      %v756 = vmul.f32 %v538, %v538
      %v757 = vsel %vm752, %v756, 0.0
      %758 = vadd.xlane.f32.xlu0 %v757
      %v759 = vpop.xlane.xlu0 %758
      %v760 = vmul.f32 %v748, %v748
      %v761 = vsel %vm752, %v760, 0.0
      %762 = vadd.xlane.f32.xlu0 %v761
      %v763 = vpop.xlane.xlu0 %762
      %v764 = vmax.f32 %v759, 1e-16
      %v765 = vrsqrt.pop %v764
      %v766 = vmax.f32 %v763, 1e-16
      %v767 = vrsqrt.pop %v766
      %v768 = vmul.f32 %v755, %v765
      %v769 = vmul.f32 %v768, %v767
      %v770 = vsub.f32 0.0, %v769
      %v771 = vmul.f32 %v770, 1.442695
      %v772 = vpow.pop %v771
      %v773 = vadd.f32 %v772, 1.0
      %v774 = vrcp.pop %v773
      %vm775 = vcmask 7168
      %776 = vst.msk [vmem:[%s215] sm:$0xff] %vm775, %v774
      %p777 = scmp.lt.s32.totalorder %s15, 1
      %s778 = scalar_select %p777, %s15, 1
      %s779 = smul.addr %s778, 8
      %s780 = scalar_lea.vmem %s4, %s779
      // Predicated region
      $region37: #{tpu_custom_call.1} parent=35 // pred_check
        %p781 = pneg %p127
      $region38: #{tpu_custom_call.1} parent=35 // pred_check_branch
        %783 = sbr.rel (%p781) target = $region40
      $region39: #{tpu_custom_call.1} parent=35 // pred_region
        _
      $region40: #{tpu_custom_call.1} parent=35 // pred_fallthru
        _
    $region36: #{tpu_custom_call.1} parent=5 // pred_fallthru
      _
    %p784 = scmp.le.s32.totalorder 2, %s10
    // Predicated region
    $region41: #{tpu_custom_call.1} parent=5 // pred_check
      %p785 = pneg %p784
    $region42: #{tpu_custom_call.1} parent=5 // pred_check_branch
      %787 = sbr.rel (%p785) target = $region44
    $region43: #{tpu_custom_call.1} parent=5 // pred_region
      %s788 = ssub.s32 %s10, 2
      // Predicated region
      $region45: #{tpu_custom_call.1} parent=43 // pred_check
        %p789 = pneg %p133
      $region46: #{tpu_custom_call.1} parent=43 // pred_check_branch
        %791 = sbr.rel (%p789) target = $region48
      $region47: #{tpu_custom_call.1} parent=43 // pred_region
        %p792 = scmp.lt.s32.totalorder %s16, 1
        %s793 = scalar_select %p792, %s16, 1
        %s794 = smul.addr %s793, 8
        %s795 = scalar_lea.vmem %s4, %s794
      $region48: #{tpu_custom_call.1} parent=43 // pred_fallthru
        _
    $region44: #{tpu_custom_call.1} parent=5 // pred_fallthru
      _
  $region6: #{tpu_custom_call.1} parent=0 // loop_footer
    %s14 = sadd.s32 1, %s10
  $region7: #{tpu_custom_call.1} parent=0 // loop_footer_branch
    %9 = sbr.rel target = $region3
  $region8: #{tpu_custom_call.1} parent=0 // loop_exit
    _

</llo_original>
